<compile_context>
chip_gen: v5e
topology: v5e:2x2
jax: 0.10.0
libtpu: 0.0.40
codegen_flags: <defaults>
</compile_context>

<pallas_src>
import functools
import math

import jax
import jax.numpy as jnp
import numpy as np
from jax.experimental import pallas as pl
from jax.experimental.pallas import tpu as pltpu

LANE = 128
SUBLANE = 8
# Conservative per-core VMEM budget across generations (v7x physical = 64 MiB).
_VMEM_BUDGET = 48 * 1024 * 1024
_VMEM_CEIL = 64 * 1024 * 1024


def _round_up(x, m):
    return (x + m - 1) // m * m


def _cdiv(a, b):
    return -(-a // b)


def _gelu(x, approximate):
    if approximate:
        # tanh form -> EUP (separate VLIW slot from the MXU/VALU).
        return jax.nn.gelu(x, approximate=True)
    # nn.GELU() default: exact erf formulation (f32).
    return 0.5 * x * (1.0 + jax.lax.erf(x * (1.0 / math.sqrt(2.0))))


# ----------------------------------------------------------------------------
# Kernels
# ----------------------------------------------------------------------------
def _mlp_kernel_resident(x_ref, w1_ref, b1_ref, w2_ref, b2_ref, o_ref, *,
                         approximate):
    """Weights fully resident in VMEM; o = GELU(x @ W1 + b1) @ W2 + b2."""
    x = x_ref[...].astype(jnp.bfloat16)                       # cast in VMEM
    h = jnp.dot(x, w1_ref[...], preferred_element_type=jnp.float32)
    h = _gelu(h + b1_ref[...], approximate)                   # f32 epilogue
    o = jnp.dot(h.astype(jnp.bfloat16), w2_ref[...],
                preferred_element_type=jnp.float32)
    o_ref[...] = (o + b2_ref[...]).astype(o_ref.dtype)


def _mlp_kernel_hchunk(x_ref, w1_ref, b1_ref, w2_ref, b2_ref, o_ref, acc_ref, *,
                       approximate):
    """Hidden-dim streamed: acc += GELU(x @ W1[:, hc] + b1[hc]) @ W2[hc, :]."""
    hc = pl.program_id(1)

    @pl.when(hc == 0)
    def _():
        acc_ref[...] = jnp.zeros_like(acc_ref)

    x = x_ref[...].astype(jnp.bfloat16)
    h = jnp.dot(x, w1_ref[...], preferred_element_type=jnp.float32)
    h = _gelu(h + b1_ref[...], approximate)
    acc_ref[...] += jnp.dot(h.astype(jnp.bfloat16), w2_ref[...],
                            preferred_element_type=jnp.float32)

    @pl.when(hc == pl.num_programs(1) - 1)
    def _():
        o_ref[...] = (acc_ref[...] + b2_ref[...]).astype(o_ref.dtype)


# ----------------------------------------------------------------------------
# Parameters: PyTorch-style Linear init + one-time lane-padded bf16 pack.
# ----------------------------------------------------------------------------
def init_mlp_params(key, in_features, hidden_features=None, out_features=None):
    hidden_features = hidden_features or in_features
    out_features = out_features or in_features
    k1, k2, k3, k4 = jax.random.split(key, 4)
    lim1 = 1.0 / math.sqrt(in_features)
    lim2 = 1.0 / math.sqrt(hidden_features)
    return {
        "fc1_w": jax.random.uniform(k1, (in_features, hidden_features), jnp.float32, -lim1, lim1),
        "fc1_b": jax.random.uniform(k2, (hidden_features,), jnp.float32, -lim1, lim1),
        "fc2_w": jax.random.uniform(k3, (hidden_features, out_features), jnp.float32, -lim2, lim2),
        "fc2_b": jax.random.uniform(k4, (out_features,), jnp.float32, -lim2, lim2),
    }


def pack_mlp_params(params):
    """Pad weights/biases to 128-lane multiples ONCE and pre-cast matmul weights
    to bf16.  Padded fc1 columns give GELU(0+b_pad=0)=0 contributions through
    zero W2 rows, so padding never leaks into real outputs."""
    din, dh = params["fc1_w"].shape
    dh2, dout = params["fc2_w"].shape
    assert dh == dh2
    din_p, dh_p, dout_p = _round_up(din, LANE), _round_up(dh, LANE), _round_up(dout, LANE)
    w1 = jnp.pad(params["fc1_w"], ((0, din_p - din), (0, dh_p - dh))).astype(jnp.bfloat16)
    b1 = jnp.pad(params["fc1_b"], (0, dh_p - dh)).astype(jnp.float32).reshape(1, dh_p)
    w2 = jnp.pad(params["fc2_w"], ((0, dh_p - dh), (0, dout_p - dout))).astype(jnp.bfloat16)
    b2 = jnp.pad(params["fc2_b"], (0, dout_p - dout)).astype(jnp.float32).reshape(1, dout_p)
    return dict(w1=w1, b1=b1, w2=w2, b2=b2, din=din, dout=dout,
                din_p=din_p, dh_p=dh_p, dout_p=dout_p)


# ----------------------------------------------------------------------------
# Tile selection / VMEM budgeting
# ----------------------------------------------------------------------------
def _vmem_estimate(bm, bh, din_p, dout_p, out_bytes, n_h):
    est = 0
    est += bm * din_p * 4 * 2            # x tile (worst case f32, double buffer)
    est += din_p * bh * 2 * 2            # W1 tile (bf16, double buffer)
    est += SUBLANE * bh * 4 * 2          # b1 tile
    est += bh * dout_p * 2 * 2           # W2 tile (bf16, double buffer)
    est += SUBLANE * dout_p * 4 * 2      # b2 tile
    est += bm * dout_p * out_bytes * 2   # out tile (double buffer)
    if n_h > 1:
        est += bm * dout_p * 4           # f32 accumulator scratch
    est += bm * bh * (4 + 2)             # h intermediate (f32 + bf16 copy)
    return est


def _choose_bm(M):
    if M <= 128:
        return _round_up(max(M, 1), SUBLANE)          # one sublane-aligned tile
    # >= 2 row tiles so v7x's 2 TensorCores both get work; ~512-row tiles for
    # large M to amortize the ~0.35 us per-grid-step overhead (v6e).
    n_tiles = max(2, _cdiv(M, 512))
    return _round_up(_cdiv(M, n_tiles), LANE)


def _choose_bh(bm, din_p, dh_p, dout_p, out_bytes, max_hidden_block):
    n_lane_chunks = dh_p // LANE
    for n in range(1, n_lane_chunks + 1):
        if n_lane_chunks % n:
            continue                                   # bh must divide dh_p
        bh = dh_p // n
        if max_hidden_block is not None and bh > max_hidden_block:
            continue
        if _vmem_estimate(bm, bh, din_p, dout_p, out_bytes, n) <= _VMEM_BUDGET:
            return bh
    return LANE


def _choose_tiles(M, din_p, dh_p, dout_p, out_bytes, max_hidden_block):
    bm = _choose_bm(M)
    while True:
        bh = _choose_bh(bm, din_p, dh_p, dout_p, out_bytes, max_hidden_block)
        if (_vmem_estimate(bm, bh, din_p, dout_p, out_bytes, dh_p // bh)
                <= _VMEM_BUDGET or bm <= LANE):
            return bm, bh
        bm = max(LANE, bm // 2)                        # shrink rows as last resort


# ----------------------------------------------------------------------------
# Forward wrapper (matches Mlp.forward; dropout p=0 / eval mode == identity)
# ----------------------------------------------------------------------------
def mlp_forward(packed, x, *, out_dtype=jnp.float32, approximate_gelu=False,
                max_hidden_block=None):
    """x: (..., in_features) -> (..., out_features).

    approximate_gelu=False keeps nn.GELU()'s exact-erf semantics (default);
    True switches to the tanh form (EUP-friendly, slightly different numerics).
    out_dtype=jnp.bfloat16 halves output HBM traffic when the consumer is bf16.
    """
    orig_shape = x.shape
    din, dout = packed["din"], packed["dout"]
    assert orig_shape[-1] == din
    M = int(np.prod(orig_shape[:-1]))
    x2 = x.reshape(M, din)

    din_p, dh_p, dout_p = packed["din_p"], packed["dh_p"], packed["dout_p"]
    out_bytes = jnp.dtype(out_dtype).itemsize

    bm, bh = _choose_tiles(M, din_p, dh_p, dout_p, out_bytes, max_hidden_block)
    Mp = _round_up(M, bm)
    n_row, n_h = Mp // bm, dh_p // bh

    # Input fast path: no pad -> pass x as-is (original dtype), cast to bf16
    # inside the kernel.  Only pad (and cast during the pad) when required.
    if Mp == M and din_p == din:
        x_in = x2
    else:
        x_in = jnp.pad(x2, ((0, Mp - M), (0, din_p - din))).astype(jnp.bfloat16)

    est = _vmem_estimate(bm, bh, din_p, dout_p, out_bytes, n_h)
    vmem_limit = int(min(_VMEM_CEIL, max(2 * est, 16 * 1024 * 1024)))

    w_reads = n_row if n_h > 1 else 1    # streamed weights re-read per row tile
    cost = pl.CostEstimate(
        flops=int(2 * Mp * dh_p * (din_p + dout_p)),
        transcendentals=int(Mp * dh_p),
        bytes_accessed=int(x_in.size * x_in.dtype.itemsize
                           + w_reads * (packed["w1"].size + packed["w2"].size) * 2
                           + (packed["b1"].size + packed["b2"].size) * 4
                           + Mp * dout_p * out_bytes))

    out_shape = jax.ShapeDtypeStruct((Mp, dout_p), out_dtype)
    args = (x_in, packed["w1"], packed["b1"], packed["w2"], packed["b2"])

    if n_h == 1:
        # Weights fully resident (constant index_map -> fetched once, no re-DMA).
        # TODO(synk): could single-buffer these constant blocks via
        # pipeline_mode=pl.Buffered(1) to halve their VMEM footprint.
        out = pl.pallas_call(
            functools.partial(_mlp_kernel_resident, approximate=approximate_gelu),
            out_shape=out_shape,
            grid=(n_row,),
            in_specs=[
                pl.BlockSpec((bm, din_p), lambda i: (i, 0)),
                pl.BlockSpec((din_p, dh_p), lambda i: (0, 0)),
                pl.BlockSpec((1, dh_p), lambda i: (0, 0)),
                pl.BlockSpec((dh_p, dout_p), lambda i: (0, 0)),
                pl.BlockSpec((1, dout_p), lambda i: (0, 0)),
            ],
            out_specs=pl.BlockSpec((bm, dout_p), lambda i: (i, 0)),
            compiler_params=pltpu.CompilerParams(
                dimension_semantics=("parallel",),
                vmem_limit_bytes=vmem_limit),
            cost_estimate=cost,
        )(*args)
    else:
        # Hidden-dim streamed path: W1 column / W2 row tiles flow through the
        # BlockSpec pipeline; f32 accumulator lives in VMEM scratch.
        out = pl.pallas_call(
            functools.partial(_mlp_kernel_hchunk, approximate=approximate_gelu),
            out_shape=out_shape,
            grid=(n_row, n_h),
            in_specs=[
                pl.BlockSpec((bm, din_p), lambda i, h: (i, 0)),
                pl.BlockSpec((din_p, bh), lambda i, h: (0, h)),
                pl.BlockSpec((1, bh), lambda i, h: (0, h)),
                pl.BlockSpec((bh, dout_p), lambda i, h: (h, 0)),
                pl.BlockSpec((1, dout_p), lambda i, h: (0, 0)),
            ],
            out_specs=pl.BlockSpec((bm, dout_p), lambda i, h: (i, 0)),
            scratch_shapes=[pltpu.VMEM((bm, dout_p), jnp.float32)],
            compiler_params=pltpu.CompilerParams(
                dimension_semantics=("parallel", "arbitrary"),
                vmem_limit_bytes=vmem_limit),
            cost_estimate=cost,
        )(*args)

    # Output fast path: skip the slice (an extra HBM round trip) when nothing
    # was padded.
    if Mp != M or dout_p != dout:
        out = out[:M, :dout]
    return out.reshape(*orig_shape[:-1], dout)


# ----------------------------------------------------------------------------
# Pure-JAX f32 reference (exact-erf GELU, matching nn.GELU() default)
# ----------------------------------------------------------------------------
def _mlp_ref(params, x):
    shape = x.shape
    h = x.reshape(-1, shape[-1]) @ params["fc1_w"] + params["fc1_b"]
    h = 0.5 * h * (1.0 + jax.lax.erf(h * (1.0 / math.sqrt(2.0))))
    o = h @ params["fc2_w"] + params["fc2_b"]
    return o.reshape(*shape[:-1], o.shape[-1])


# ----------------------------------------------------------------------------
# main
# ----------------------------------------------------------------------------
if __name__ == "__main__":
    key = jax.random.PRNGKey(0)
    kx1, kp1, kx2, kp2 = jax.random.split(key, 4)

    # Case 1: MUSIQ-transformer-block-like tiny shapes: tokens (B, N, C),
    # in_features = 32, hidden_features = mlp_dim = 64.  (Launch/padding bound;
    # exercises the resident-weight single-tile path with in-kernel cast.)
    B, N, C_IN, C_HID = 2, 8, 32, 64
    x1 = jax.random.normal(kx1, (B, N, C_IN), jnp.float32)
    params1 = init_mlp_params(kp1, C_IN, hidden_features=C_HID)
    packed1 = pack_mlp_params(params1)
    fwd1 = jax.jit(lambda inp: mlp_forward(packed1, inp))
    out1 = jax.block_until_ready(fwd1(x1))
    assert out1.shape == (B, N, C_IN)
    ref1 = _mlp_ref(params1, x1)
    np.testing.assert_allclose(np.asarray(out1), np.asarray(ref1),
                               rtol=5e-2, atol=2e-2)

    # Case 2: more rows (>= 2 "parallel" row tiles) and a force-capped hidden
    # block to exercise the hidden-chunked accumulator path.
    M2, C2, H2 = 384, 64, 256
    x2 = jax.random.normal(kx2, (M2, C2), jnp.float32)
    params2 = init_mlp_params(kp2, C2, hidden_features=H2)
    packed2 = pack_mlp_params(params2)
    fwd2 = jax.jit(lambda inp: mlp_forward(packed2, inp, max_hidden_block=128))
    out2 = jax.block_until_ready(fwd2(x2))
    assert out2.shape == (M2, C2)
    ref2 = _mlp_ref(params2, x2)
    np.testing.assert_allclose(np.asarray(out2), np.asarray(ref2),
                               rtol=5e-2, atol=2e-2)

    print("KERNEL_OK")
</pallas_src>

<mosaic_0001>
module attributes {stable_mosaic.version = 11 : i64} {
  func.func @_mlp_kernel_resident(%arg0: i32, %arg1: memref<16x128xbf16, #tpu.memory_space<vmem>>, %arg2: memref<128x128xbf16, #tpu.memory_space<vmem>>, %arg3: memref<1x128xf32, #tpu.memory_space<vmem>>, %arg4: memref<128x128xbf16, #tpu.memory_space<vmem>>, %arg5: memref<1x128xf32, #tpu.memory_space<vmem>>, %arg6: memref<16x128xf32, #tpu.memory_space<vmem>>) attributes {dimension_semantics = [#tpu.dimension_semantics<parallel>], iteration_bounds = array<i64: 1>, scalar_prefetch = 0 : i64, scratch_operands = 0 : i64, tpu.core_type = #tpu.core_type<tc>, window_params = [{transform_indices = @transform_0, window_bounds = array<i64: 16, 128>}, {pipeline_mode = #tpu.pipeline_mode<synchronous>, transform_indices = @transform_1, window_bounds = array<i64: 128, 128>}, {pipeline_mode = #tpu.pipeline_mode<synchronous>, transform_indices = @transform_2, window_bounds = array<i64: 1, 128>}, {pipeline_mode = #tpu.pipeline_mode<synchronous>, transform_indices = @transform_3, window_bounds = array<i64: 128, 128>}, {pipeline_mode = #tpu.pipeline_mode<synchronous>, transform_indices = @transform_4, window_bounds = array<i64: 1, 128>}, {transform_indices = @transform_5, window_bounds = array<i64: 16, 128>}]} {
    %c0 = arith.constant 0 : index
    %c0_0 = arith.constant 0 : index
    %0 = vector.load %arg1[%c0, %c0_0] : memref<16x128xbf16, #tpu.memory_space<vmem>>, vector<16x128xbf16>
    %c0_1 = arith.constant 0 : index
    %c0_2 = arith.constant 0 : index
    %1 = vector.load %arg2[%c0_1, %c0_2] : memref<128x128xbf16, #tpu.memory_space<vmem>>, vector<128x128xbf16>
    %cst = arith.constant dense<0.000000e+00> : vector<16x128xf32>
    %2 = tpu.matmul %0, %1, %cst {dimension_numbers = #tpu.dot_dimension_numbers<[1], [0], [0], [1], [0, 0, 1, 1], [], []>} : vector<16x128xbf16>, vector<128x128xbf16>, vector<16x128xf32> -> vector<16x128xf32>
    %c0_3 = arith.constant 0 : index
    %c0_4 = arith.constant 0 : index
    %3 = vector.load %arg3[%c0_3, %c0_4] : memref<1x128xf32, #tpu.memory_space<vmem>>, vector<1x128xf32>
    %4 = vector.broadcast %3 : vector<1x128xf32> to vector<16x128xf32>
    %5 = arith.addf %2, %4 : vector<16x128xf32>
    %cst_5 = arith.constant 5.000000e-01 : f32
    %6 = vector.broadcast %cst_5 : f32 to vector<16x128xf32>
    %7 = arith.mulf %6, %5 : vector<16x128xf32>
    %cst_6 = arith.constant 0.707106769 : f32
    %8 = vector.broadcast %cst_6 : f32 to vector<16x128xf32>
    %9 = arith.mulf %5, %8 : vector<16x128xf32>
    %10 = math.erf %9 : vector<16x128xf32>
    %cst_7 = arith.constant 1.000000e+00 : f32
    %11 = vector.broadcast %cst_7 : f32 to vector<16x128xf32>
    %12 = arith.addf %11, %10 : vector<16x128xf32>
    %13 = arith.mulf %7, %12 : vector<16x128xf32>
    %14 = arith.truncf %13 : vector<16x128xf32> to vector<16x128xbf16>
    %c0_8 = arith.constant 0 : index
    %c0_9 = arith.constant 0 : index
    %15 = vector.load %arg4[%c0_8, %c0_9] : memref<128x128xbf16, #tpu.memory_space<vmem>>, vector<128x128xbf16>
    %cst_10 = arith.constant dense<0.000000e+00> : vector<16x128xf32>
    %16 = tpu.matmul %14, %15, %cst_10 {dimension_numbers = #tpu.dot_dimension_numbers<[1], [0], [0], [1], [0, 0, 1, 1], [], []>} : vector<16x128xbf16>, vector<128x128xbf16>, vector<16x128xf32> -> vector<16x128xf32>
    %c0_11 = arith.constant 0 : index
    %c0_12 = arith.constant 0 : index
    %17 = vector.load %arg5[%c0_11, %c0_12] : memref<1x128xf32, #tpu.memory_space<vmem>>, vector<1x128xf32>
    %18 = vector.broadcast %17 : vector<1x128xf32> to vector<16x128xf32>
    %19 = arith.addf %16, %18 : vector<16x128xf32>
    %c0_13 = arith.constant 0 : index
    %c0_14 = arith.constant 0 : index
    %20 = vector.load %arg6[%c0_13, %c0_14] : memref<16x128xf32, #tpu.memory_space<vmem>>, vector<16x128xf32>
    tpu.vector_store %arg6[%c0_13, %c0_14], %19 {strides = array<i32>} : memref<16x128xf32, #tpu.memory_space<vmem>>, vector<16x128xf32>,
    return
  }
  func.func @transform_0(%arg0: i32) -> (i32, i32) {
    %c0_i32 = arith.constant 0 : i32
    %c0_i32_0 = arith.constant 0 : i32
    return %arg0, %c0_i32 : i32, i32
  }
  func.func @transform_1(%arg0: i32) -> (i32, i32) {
    %c0_i32 = arith.constant 0 : i32
    %c0_i32_0 = arith.constant 0 : i32
    %c0_i32_1 = arith.constant 0 : i32
    return %c0_i32, %c0_i32_0 : i32, i32
  }
  func.func @transform_2(%arg0: i32) -> (i32, i32) {
    %c0_i32 = arith.constant 0 : i32
    %c0_i32_0 = arith.constant 0 : i32
    %c0_i32_1 = arith.constant 0 : i32
    return %c0_i32, %c0_i32_0 : i32, i32
  }
  func.func @transform_3(%arg0: i32) -> (i32, i32) {
    %c0_i32 = arith.constant 0 : i32
    %c0_i32_0 = arith.constant 0 : i32
    %c0_i32_1 = arith.constant 0 : i32
    return %c0_i32, %c0_i32_0 : i32, i32
  }
  func.func @transform_4(%arg0: i32) -> (i32, i32) {
    %c0_i32 = arith.constant 0 : i32
    %c0_i32_0 = arith.constant 0 : i32
    %c0_i32_1 = arith.constant 0 : i32
    return %c0_i32, %c0_i32_0 : i32, i32
  }
  func.func @transform_5(%arg0: i32) -> (i32, i32) {
    %c0_i32 = arith.constant 0 : i32
    %c0_i32_0 = arith.constant 0 : i32
    return %arg0, %c0_i32 : i32, i32
  }
}

</mosaic_0001>

<llo_original>
// kernel: _lambda_.1
$region0: #{_lambda_.1}
  #allocation0 [shape = 'u32[]', space=smem, size = 0x4, offset = 0x4, fixed_abs, tag = 'smem constant byte address 0x4 - core index']
  #allocation1 [shape = 'u32[72,128]{1,0:T(1,128)}', space=vmem, size = 0x9000, scoped, tag = 'internal scratch']
  %s0 = inlined_call_operand.vmem [shape: bf16[16,128], index: 0, kind: input, shape index: {}]
  %s1 = inlined_call_operand.hbm [shape: bf16[128,128], index: 1, kind: input, shape index: {}]
  %s2 = inlined_call_operand.vmem [shape: f32[1,128], index: 2, kind: input, shape index: {}]
  %s3 = inlined_call_operand.hbm [shape: bf16[128,128], index: 3, kind: input, shape index: {}]
  %s4 = inlined_call_operand.vmem [shape: f32[1,128], index: 4, kind: input, shape index: {}]
  %s5 = inlined_call_operand.vmem [shape: f32[16,128], index: 5, kind: output, shape index: {}]
  %s6 = sld [smem:[#allocation0]]
  $region38: #{_lambda_.1} parent=0
    _
  %s8 = ssub.s32 1, %s6
  %s9 = scalar_select 0, %s8, %s6
  $region1: #{_lambda_.1} parent=0
    #allocation2 [shape = 'u8[32768]{0}', space=vmem, size = 0x8000, scoped, tag = 'input window, operand 1, single buffered']
    #allocation3 [shape = 's32[1]{0}', space=sflag, size = 0x4, scoped, tag = 'scoped memory for _lambda_.1']
    #allocation4 [shape = 'u8[32768]{0}', space=vmem, size = 0x8000, scoped, tag = 'input window, operand 3, single buffered']
    #allocation5 [shape = 's32[1]{0}', space=sflag, size = 0x4, scoped, tag = 'scoped memory for _lambda_.1']
    %10 = vsyncpa [#allocation3], 0
    %11 = vsyncpa [#allocation5], 0
    // Predicated region
    $region2: #{_lambda_.1} parent=1 // pred_check
      _
    $region3: #{_lambda_.1} parent=1 // pred_check_branch
      %13 = sbr.rel (0) target = $region5
    $region4: #{_lambda_.1} parent=1 // pred_region
      _
    $region5: #{_lambda_.1} parent=1 // pred_fallthru
      _
    // Predicated region
    $region6: #{_lambda_.1} parent=1 // pred_check
      _
    $region7: #{_lambda_.1} parent=1 // pred_check_branch
      %15 = sbr.rel (0) target = $region9
    $region8: #{_lambda_.1} parent=1 // pred_region
      %17 = vsyncadd [#allocation3], 0
      %s18 = sshll.u32 %s1, 4
      %s19 = int_to_ptr.hbm [resolvable:$true] %s18
      %s20 = sshll.u32 [#allocation2], 4
      %s21 = int_to_ptr.vmem [resolvable:$true] %s20
      %26 = dma.hbm_to_vmem [thread:$0]  %s19, 1024, %s21, [#allocation3], 64, 64, 4
    $region9: #{_lambda_.1} parent=1 // pred_fallthru
      _
    // Predicated region
    $region10: #{_lambda_.1} parent=1 // pred_check
      _
    $region11: #{_lambda_.1} parent=1 // pred_check_branch
      %28 = sbr.rel (0) target = $region13
    $region12: #{_lambda_.1} parent=1 // pred_region
      _
    $region13: #{_lambda_.1} parent=1 // pred_fallthru
      _
    // Predicated region
    $region14: #{_lambda_.1} parent=1 // pred_check
      _
    $region15: #{_lambda_.1} parent=1 // pred_check_branch
      %30 = sbr.rel (0) target = $region17
    $region16: #{_lambda_.1} parent=1 // pred_region
      %32 = vsyncadd [#allocation5], 0
      %s33 = sshll.u32 %s3, 4
      %s34 = int_to_ptr.hbm [resolvable:$true] %s33
      %s35 = sshll.u32 [#allocation4], 4
      %s36 = int_to_ptr.vmem [resolvable:$true] %s35
      %41 = dma.hbm_to_vmem [thread:$0]  %s34, 1024, %s36, [#allocation5], 64, 64, 4
    $region17: #{_lambda_.1} parent=1 // pred_fallthru
      _
    // Predicated region
    $region18: #{_lambda_.1} parent=1 // pred_check
      _
    $region19: #{_lambda_.1} parent=1 // pred_check_branch
      %43 = sbr.rel (0) target = $region21
    $region20: #{_lambda_.1} parent=1 // pred_region
      _
    $region21: #{_lambda_.1} parent=1 // pred_fallthru
      _
    // Predicated region
    $region22: #{_lambda_.1} parent=1 // pred_check
      _
    $region23: #{_lambda_.1} parent=1 // pred_check_branch
      %45 = sbr.rel (0) target = $region25
    $region24: #{_lambda_.1} parent=1 // pred_region
      %47 = dma.done [#allocation3], 1024
    $region25: #{_lambda_.1} parent=1 // pred_fallthru
      _
    // Predicated region
    $region26: #{_lambda_.1} parent=1 // pred_check
      _
    $region27: #{_lambda_.1} parent=1 // pred_check_branch
      %49 = sbr.rel (0) target = $region29
    $region28: #{_lambda_.1} parent=1 // pred_region
      %51 = dma.done [#allocation5], 1024
    $region29: #{_lambda_.1} parent=1 // pred_fallthru
      _
    %v52 = vld [vmem:[%s0] sm:$0xf]
    %v53 = vld [vmem:[%s0 + $0x4] sm:$0xf]
    %v54 = vld [vmem:[#allocation2] sm:$0xf]
    %v55 = vld [vmem:[#allocation2 + $0x4] sm:$0xf]
    %v56 = vld [vmem:[#allocation2 + $0x8] sm:$0xf]
    %v57 = vld [vmem:[#allocation2 + $0xc] sm:$0xf]
    %v58 = vld [vmem:[#allocation2 + $0x10] sm:$0xf]
    %v59 = vld [vmem:[#allocation2 + $0x14] sm:$0xf]
    %v60 = vld [vmem:[#allocation2 + $0x18] sm:$0xf]
    %v61 = vld [vmem:[#allocation2 + $0x1c] sm:$0xf]
    %v62 = vld [vmem:[#allocation2 + $0x20] sm:$0xf]
    %v63 = vld [vmem:[#allocation2 + $0x24] sm:$0xf]
    %v64 = vld [vmem:[#allocation2 + $0x28] sm:$0xf]
    %v65 = vld [vmem:[#allocation2 + $0x2c] sm:$0xf]
    %v66 = vld [vmem:[#allocation2 + $0x30] sm:$0xf]
    %v67 = vld [vmem:[#allocation2 + $0x34] sm:$0xf]
    %v68 = vld [vmem:[#allocation2 + $0x38] sm:$0xf]
    %v69 = vld [vmem:[#allocation2 + $0x3c] sm:$0xf]
    %v70 = vld [vmem:[%s2] sm:$0x1]
    %v72 = vperm.slane %v70, 0
    %v76 = vunpack.c.l.b16 %v52
    %v77 = vunpack.c.l.b16 %v53
    %v78 = vpack.c.b16 %v77, %v76
    %v96 = vunpack.c.l.b16 %v54
    %v97 = vunpack.c.l.b16 %v55
    %v98 = vunpack.c.l.b16 %v56
    %v99 = vunpack.c.l.b16 %v57
    %v100 = vunpack.c.l.b16 %v58
    %v101 = vunpack.c.l.b16 %v59
    %v102 = vunpack.c.l.b16 %v60
    %v103 = vunpack.c.l.b16 %v61
    %v104 = vunpack.c.l.b16 %v62
    %v105 = vunpack.c.l.b16 %v63
    %v106 = vunpack.c.l.b16 %v64
    %v107 = vunpack.c.l.b16 %v65
    %v108 = vunpack.c.l.b16 %v66
    %v109 = vunpack.c.l.b16 %v67
    %v110 = vunpack.c.l.b16 %v68
    %v111 = vunpack.c.l.b16 %v69
    %v112 = vpack.c.b16 %v97, %v96
    %v113 = vpack.c.b16 %v99, %v98
    %v114 = vpack.c.b16 %v101, %v100
    %v115 = vpack.c.b16 %v103, %v102
    %v116 = vpack.c.b16 %v105, %v104
    %v117 = vpack.c.b16 %v107, %v106
    %v118 = vpack.c.b16 %v109, %v108
    %v119 = vpack.c.b16 %v111, %v110
    %128 = vmatpush.bf16.msra.mxu0 %v119
    %129 = vmatpush.bf16.msra.mxu0 %v118
    %130 = vmatpush.bf16.msra.mxu0 %v117
    %131 = vmatpush.bf16.msra.mxu0 %v116
    %132 = vmatpush.bf16.msra.mxu0 %v115
    %133 = vmatpush.bf16.msra.mxu0 %v114
    %134 = vmatpush.bf16.msra.mxu0 %v113
    %135 = vmatpush.bf16.msra.mxu0 %v112
    %136 = vmatmul.bf16.gmra.mxu0 %v78
    %v137 = vpop.f32.mrf.mxu0
    %v138 = vadd.f32 %v72, %v137
    %v139 = vpop.f32.mrf.mxu0
    %v140 = vadd.f32 %v72, %v139
    %141 = vdwg.mxu0
    %v142 = vmul.f32 %v138, 0.5
    %v143 = vmul.f32 %v140, 0.5
    %v144 = vmul.f32 %v138, 0.70710677
    %v145 = vmul.f32 %v140, 0.70710677
    %v146 = vmul.f32 %v144, %v144
    %v147 = vmin.f32 16.0, %v146
    %v148 = vmul.f32 %v147, 2.1237322e-06
    %v149 = vadd.f32 %v148, 0.00028619796
    %v150 = vmul.f32 %v147, %v149
    %v151 = vadd.f32 %v150, 0.0036580483
    %v152 = vmul.f32 %v147, %v151
    %v153 = vadd.f32 %v152, 0.05243302
    %v154 = vmul.f32 %v147, %v153
    %v155 = vadd.f32 %v154, 0.18741608
    %v156 = vmul.f32 %v147, %v155
    %v157 = vadd.f32 %v156, 1.1283791
    %v158 = vmul.f32 %v144, %v157
    %v159 = vmul.f32 %v147, 3.8918573e-05
    %v160 = vadd.f32 %v159, 0.001143296
    %v161 = vmul.f32 %v147, %v160
    %v162 = vadd.f32 %v161, 0.014752088
    %v163 = vmul.f32 %v147, %v162
    %v164 = vadd.f32 %v163, 0.112945676
    %v165 = vmul.f32 %v147, %v164
    %v166 = vadd.f32 %v165, 0.4994258
    %v167 = vmul.f32 %v147, %v166
    %v168 = vadd.f32 %v167, 1.0
    %v169 = vrcp.pop %v168
    %v170 = vmul.f32 %v168, %v169
    %v171 = vsub.f32 1.0, %v170
    %v172 = vmul.f32 %v169, %v171
    %v173 = vadd.f32 %v169, %v172
    %vm174 = vweird.f32 %v168
    %vm175 = vweird.f32 %v169
    %vm176 = vmor %vm174, %vm175
    %v177 = vsel %vm176, %v169, %v173
    %v178 = vand.u32 2147483647, %v168
    %vm179 = vcmp.eq.f32.partialorder %v178, 8.507059e+37
    %v180 = vand.u32 %v168, 2147483648
    %v181 = vor.u32 1.1754944e-38, %v180
    %v182 = vsel %vm179, %v181, %v177
    %v183 = vmul.f32 %v158, %v182
    %v184 = vmin.f32 %v183, 1.0
    %v185 = vmax.f32 %v184, -1.0
    %v186 = vmul.f32 %v145, %v145
    %v187 = vmin.f32 16.0, %v186
    %v188 = vmul.f32 %v187, 2.1237322e-06
    %v189 = vadd.f32 %v188, 0.00028619796
    %v190 = vmul.f32 %v187, %v189
    %v191 = vadd.f32 %v190, 0.0036580483
    %v192 = vmul.f32 %v187, %v191
    %v193 = vadd.f32 %v192, 0.05243302
    %v194 = vmul.f32 %v187, %v193
    %v195 = vadd.f32 %v194, 0.18741608
    %v196 = vmul.f32 %v187, %v195
    %v197 = vadd.f32 %v196, 1.1283791
    %v198 = vmul.f32 %v145, %v197
    %v199 = vmul.f32 %v187, 3.8918573e-05
    %v200 = vadd.f32 %v199, 0.001143296
    %v201 = vmul.f32 %v187, %v200
    %v202 = vadd.f32 %v201, 0.014752088
    %v203 = vmul.f32 %v187, %v202
    %v204 = vadd.f32 %v203, 0.112945676
    %v205 = vmul.f32 %v187, %v204
    %v206 = vadd.f32 %v205, 0.4994258
    %v207 = vmul.f32 %v187, %v206
    %v208 = vadd.f32 %v207, 1.0
    %v209 = vrcp.pop %v208
    %v210 = vmul.f32 %v208, %v209
    %v211 = vsub.f32 1.0, %v210
    %v212 = vmul.f32 %v209, %v211
    %v213 = vadd.f32 %v209, %v212
    %vm214 = vweird.f32 %v208
    %vm215 = vweird.f32 %v209
    %vm216 = vmor %vm214, %vm215
    %v217 = vsel %vm216, %v209, %v213
    %v218 = vand.u32 2147483647, %v208
    %vm219 = vcmp.eq.f32.partialorder %v218, 8.507059e+37
    %v220 = vand.u32 %v208, 2147483648
    %v221 = vor.u32 1.1754944e-38, %v220
    %v222 = vsel %vm219, %v221, %v217
    %v223 = vmul.f32 %v198, %v222
    %v224 = vmin.f32 %v223, 1.0
    %v225 = vmax.f32 %v224, -1.0
    %v226 = vadd.f32 %v185, 1.0
    %v227 = vadd.f32 %v225, 1.0
    %v228 = vmul.f32 %v142, %v226
    %v229 = vmul.f32 %v143, %v227
    %v230 = vpack.c.bf16 %v229, %v228
    %v231 = vld [vmem:[#allocation4] sm:$0xf]
    %v232 = vld [vmem:[#allocation4 + $0x4] sm:$0xf]
    %v233 = vld [vmem:[#allocation4 + $0x8] sm:$0xf]
    %v234 = vld [vmem:[#allocation4 + $0xc] sm:$0xf]
    %v235 = vld [vmem:[#allocation4 + $0x10] sm:$0xf]
    %v236 = vld [vmem:[#allocation4 + $0x14] sm:$0xf]
    %v237 = vld [vmem:[#allocation4 + $0x18] sm:$0xf]
    %v238 = vld [vmem:[#allocation4 + $0x1c] sm:$0xf]
    %v239 = vld [vmem:[#allocation4 + $0x20] sm:$0xf]
    %v240 = vld [vmem:[#allocation4 + $0x24] sm:$0xf]
    %v241 = vld [vmem:[#allocation4 + $0x28] sm:$0xf]
    %v242 = vld [vmem:[#allocation4 + $0x2c] sm:$0xf]
    %v243 = vld [vmem:[#allocation4 + $0x30] sm:$0xf]
    %v244 = vld [vmem:[#allocation4 + $0x34] sm:$0xf]
    %v245 = vld [vmem:[#allocation4 + $0x38] sm:$0xf]
    %v246 = vld [vmem:[#allocation4 + $0x3c] sm:$0xf]
    %v247 = vld [vmem:[%s4] sm:$0x1]
    %v249 = vperm.slane %v247, 0
    %v267 = vunpack.c.l.b16 %v231
    %v268 = vunpack.c.l.b16 %v232
    %v269 = vunpack.c.l.b16 %v233
    %v270 = vunpack.c.l.b16 %v234
    %v271 = vunpack.c.l.b16 %v235
    %v272 = vunpack.c.l.b16 %v236
    %v273 = vunpack.c.l.b16 %v237
    %v274 = vunpack.c.l.b16 %v238
    %v275 = vunpack.c.l.b16 %v239
    %v276 = vunpack.c.l.b16 %v240
    %v277 = vunpack.c.l.b16 %v241
    %v278 = vunpack.c.l.b16 %v242
    %v279 = vunpack.c.l.b16 %v243
    %v280 = vunpack.c.l.b16 %v244
    %v281 = vunpack.c.l.b16 %v245
    %v282 = vunpack.c.l.b16 %v246
    %v283 = vpack.c.b16 %v268, %v267
    %v284 = vpack.c.b16 %v270, %v269
    %v285 = vpack.c.b16 %v272, %v271
    %v286 = vpack.c.b16 %v274, %v273
    %v287 = vpack.c.b16 %v276, %v275
    %v288 = vpack.c.b16 %v278, %v277
    %v289 = vpack.c.b16 %v280, %v279
    %v290 = vpack.c.b16 %v282, %v281
    %299 = vmatpush.bf16.msra.mxu0 %v290
    %300 = vmatpush.bf16.msra.mxu0 %v289
    %301 = vmatpush.bf16.msra.mxu0 %v288
    %302 = vmatpush.bf16.msra.mxu0 %v287
    %303 = vmatpush.bf16.msra.mxu0 %v286
    %304 = vmatpush.bf16.msra.mxu0 %v285
    %305 = vmatpush.bf16.msra.mxu0 %v284
    %306 = vmatpush.bf16.msra.mxu0 %v283
    %307 = vmatmul.bf16.gmra.mxu0 %v230
    %v308 = vpop.f32.mrf.mxu0
    %v309 = vadd.f32 %v249, %v308
    %v310 = vpop.f32.mrf.mxu0
    %v311 = vadd.f32 %v249, %v310
    %312 = vdwg.mxu0
    %313 = vst [vmem:[%s5] sm:$0xff] %v309
    %314 = vst [vmem:[%s5 + $0x8] sm:$0xff] %v311
    // Predicated region
    $region30: #{_lambda_.1} parent=1 // pred_check
      _
    $region31: #{_lambda_.1} parent=1 // pred_check_branch
      %316 = sbr.rel (0) target = $region33
    $region32: #{_lambda_.1} parent=1 // pred_region
      _
    $region33: #{_lambda_.1} parent=1 // pred_fallthru
      _
    // Predicated region
    $region34: #{_lambda_.1} parent=1 // pred_check
      _
    $region35: #{_lambda_.1} parent=1 // pred_check_branch
      %318 = sbr.rel (0) target = $region37
    $region36: #{_lambda_.1} parent=1 // pred_region
      _
    $region37: #{_lambda_.1} parent=1 // pred_fallthru
      _
    %319 = vsyncpa [#allocation3], 1
    %320 = vsyncpa [#allocation5], 1

</llo_original>
